<compile_context>
chip_gen: v6e
topology: v6e:2x2x1
jax: 0.10.0
libtpu: 0.0.40
codegen_flags: <defaults>
</compile_context>

<pallas_src>
import functools

import jax
import jax.numpy as jnp
from jax.experimental import pallas as pl
from jax.experimental.pallas import tpu as pltpu


# ----------------------------------------------------------------------------- kernel
def bayes_mlp_kernel(x_ref, w1_ref, b1_ref, w2_ref, b2_ref, w3_ref, b3_ref, o_ref):
    """One batch tile of: relu(x@W1+b1) -> relu(@W2+b2) -> @W3+b3 (W3/b3 lane-padded to 8)."""
    # x arrives as f32 straight from HBM; cast on the VPU (free vs. an extra DMA pass).
    x = x_ref[...].astype(jnp.bfloat16)                              # (TM, in)

    h1 = jnp.dot(x, w1_ref[...], preferred_element_type=jnp.float32) + b1_ref[...]
    h1 = jnp.maximum(h1, 0.0).astype(jnp.bfloat16)                   # (TM, 16)

    h2 = jnp.dot(h1, w2_ref[...], preferred_element_type=jnp.float32) + b2_ref[...]
    h2 = jnp.maximum(h2, 0.0).astype(jnp.bfloat16)                   # (TM, 8)

    o_ref[...] = (
        jnp.dot(h2, w3_ref[...], preferred_element_type=jnp.float32) + b3_ref[...]
    ).astype(o_ref.dtype)                                            # (TM, 8)


# ----------------------------------------------------------------------------- wrapper
def _round_up(n, m):
    return pl.cdiv(n, m) * m


def materialize_bayes_params(raw_params, *, matmul_dtype=jnp.bfloat16, lane_pad=8):
    """Hoisted reparameterization (one-time, eval-style single epsilon sample).

    raw_params: 18 arrays in torch BayesLinear layout
      [w1_mu(out,in), w1_log_sigma, w1_eps, b1_mu(out,), b1_log_sigma, b1_eps, ... x3]
    Returns ((W1,b1,W2,b2,W3,b3), out_dim) with weights transposed to (in,out),
    the last layer zero-padded on the out axis to a multiple of `lane_pad`,
    weights cast to `matmul_dtype` and biases kept f32.
    """
    (w1mu, w1ls, w1eps, b1mu, b1ls, b1eps,
     w2mu, w2ls, w2eps, b2mu, b2ls, b2eps,
     w3mu, w3ls, w3eps, b3mu, b3ls, b3eps) = raw_params

    def mk_w(mu, ls, eps):                       # (out, in) -> (in, out)
        return (mu + jnp.exp(ls) * eps).T

    def mk_b(mu, ls, eps):                       # (out,) -> (1, out)
        return (mu + jnp.exp(ls) * eps).reshape(1, -1)

    w1, b1 = mk_w(w1mu, w1ls, w1eps), mk_b(b1mu, b1ls, b1eps)
    w2, b2 = mk_w(w2mu, w2ls, w2eps), mk_b(b2mu, b2ls, b2eps)
    w3, b3 = mk_w(w3mu, w3ls, w3eps), mk_b(b3mu, b3ls, b3eps)

    out_dim = w3.shape[1]
    pad = int(_round_up(out_dim, lane_pad)) - out_dim
    if pad:
        w3 = jnp.pad(w3, ((0, 0), (0, pad)))
        b3 = jnp.pad(b3, ((0, 0), (0, pad)))

    mats = (w1.astype(matmul_dtype), b1.astype(jnp.float32),
            w2.astype(matmul_dtype), b2.astype(jnp.float32),
            w3.astype(matmul_dtype), b3.astype(jnp.float32))
    return mats, out_dim


@functools.partial(jax.jit, static_argnames=("out_dim", "tile_m"))
def bayesian_enet_forward(x, mat_params, out_dim, *, tile_m=4096):
    """x: (B, in_features) f32.  mat_params: output of materialize_bayes_params."""
    w1, b1, w2, b2, w3, b3 = mat_params
    B, in_features = x.shape
    out_pad = w3.shape[1]                       # 8 (out_dim padded to sub-lane multiple)

    # Batch tile: multiple of 16 (bf16 sublane packing), capped at tile_m.
    TM = int(min(tile_m, _round_up(B, 16)))
    # Keep >= 2 grid steps when the batch allows it so ("parallel",) can split
    # work across v7x's two TensorCores (no-op on v5e/v6e, avoids padding blowup
    # for tiny batches).
    if TM >= B and B > 16:
        TM = int(_round_up(pl.cdiv(B, 2), 16))
    Bp = int(_round_up(B, TM))

    xp = x
    if Bp != B:
        xp = jnp.pad(xp, ((0, Bp - B), (0, 0)))

    tile_map = lambda i: (i, 0)     # x / out stream over the batch grid
    const_map = lambda i: (0, 0)    # weights & biases stay VMEM-resident (fetched once)

    # Advisory cost hint: declares the kernel HBM-bound so XLA can overlap neighbours.
    flops = 2 * Bp * (in_features * 16 + 16 * 8 + 8 * out_pad)
    bytes_accessed = (
        Bp * in_features * 4 + Bp * out_pad * 4
        + (w1.size + w2.size + w3.size) * 2 + (b1.size + b2.size + b3.size) * 4
    )

    out = pl.pallas_call(
        bayes_mlp_kernel,
        out_shape=jax.ShapeDtypeStruct((Bp, out_pad), jnp.float32),
        grid=(Bp // TM,),
        in_specs=[
            pl.BlockSpec((TM, in_features), tile_map),
            pl.BlockSpec(w1.shape, const_map),
            pl.BlockSpec(b1.shape, const_map),
            pl.BlockSpec(w2.shape, const_map),
            pl.BlockSpec(b2.shape, const_map),
            pl.BlockSpec(w3.shape, const_map),
            pl.BlockSpec(b3.shape, const_map),
        ],
        out_specs=pl.BlockSpec((TM, out_pad), tile_map),
        compiler_params=pltpu.CompilerParams(
            dimension_semantics=("parallel",),   # megacore sharding on v7x
        ),
        cost_estimate=pl.CostEstimate(
            flops=flops, transcendentals=0, bytes_accessed=bytes_accessed),
    )(xp, w1, b1, w2, b2, w3, b3)

    return out[:B, :out_dim]


# ----------------------------------------------------------------------------- references
def _reference_forward_f32(x, raw_params):
    """Pure-f32 module semantics (torch layout: y = x @ W.T + b)."""
    (w1mu, w1ls, w1eps, b1mu, b1ls, b1eps,
     w2mu, w2ls, w2eps, b2mu, b2ls, b2eps,
     w3mu, w3ls, w3eps, b3mu, b3ls, b3eps) = raw_params
    w1 = w1mu + jnp.exp(w1ls) * w1eps
    b1 = b1mu + jnp.exp(b1ls) * b1eps
    w2 = w2mu + jnp.exp(w2ls) * w2eps
    b2 = b2mu + jnp.exp(b2ls) * b2eps
    w3 = w3mu + jnp.exp(w3ls) * w3eps
    b3 = b3mu + jnp.exp(b3ls) * b3eps
    h = jnp.maximum(x @ w1.T + b1, 0.0)
    h = jnp.maximum(h @ w2.T + b2, 0.0)
    return h @ w3.T + b3


def _reference_forward_materialized(x, mat_params, out_dim):
    """Same dataflow/dtypes as the kernel (bf16 matmul inputs, f32 accumulation)."""
    w1, b1, w2, b2, w3, b3 = mat_params
    xb = x.astype(jnp.bfloat16)
    h1 = jnp.maximum(jnp.dot(xb, w1, preferred_element_type=jnp.float32) + b1, 0.0)
    h1 = h1.astype(jnp.bfloat16)
    h2 = jnp.maximum(jnp.dot(h1, w2, preferred_element_type=jnp.float32) + b2, 0.0)
    h2 = h2.astype(jnp.bfloat16)
    y = jnp.dot(h2, w3, preferred_element_type=jnp.float32) + b3
    return y[:, :out_dim]


# ----------------------------------------------------------------------------- params
def make_bayes_params(key, in_features=32, output_dim=5):
    """Deterministic synthetic BayesLinear params in torch layout:
    weight (out, in), bias (out,), for the three layers in->16->8->output_dim."""
    dims = [(in_features, 16), (16, 8), (8, output_dim)]
    params = []
    for fan_in, fan_out in dims:
        key, k_wmu, k_weps, k_bmu, k_beps = jax.random.split(key, 5)
        bound = 1.0 / jnp.sqrt(fan_in)
        w_mu = jax.random.uniform(k_wmu, (fan_out, fan_in), jnp.float32, -bound, bound)
        w_log_sigma = jnp.full((fan_out, fan_in), -3.0, jnp.float32)
        w_eps = jax.random.normal(k_weps, (fan_out, fan_in), jnp.float32)
        b_mu = jax.random.uniform(k_bmu, (fan_out,), jnp.float32, -bound, bound)
        b_log_sigma = jnp.full((fan_out,), -3.0, jnp.float32)
        b_eps = jax.random.normal(k_beps, (fan_out,), jnp.float32)
        params += [w_mu, w_log_sigma, w_eps, b_mu, b_log_sigma, b_eps]
    return params


# ----------------------------------------------------------------------------- main
if __name__ == "__main__":
    key = jax.random.PRNGKey(0)
    k_x, k_p = jax.random.split(key)

    B, in_features, output_dim = 8, 32, 5
    x = jax.random.normal(k_x, (B, in_features), jnp.float32)
    raw_params = make_bayes_params(k_p, in_features=in_features, output_dim=output_dim)

    # One-time hoisted reparameterization (eval-time single epsilon sample).
    # TODO(synk): if multiple Monte-Carlo weight samples per call are needed,
    # reintroduce the sampling loop (e.g. as an extra grid axis).
    mat_params, out_dim = materialize_bayes_params(raw_params)

    out = bayesian_enet_forward(x, mat_params, out_dim)
    out = jax.block_until_ready(out)
    assert out.shape == (B, output_dim)

    # Exact-dataflow check (same bf16 inputs / f32 accumulation as the kernel).
    ref_bf16 = _reference_forward_materialized(x, mat_params, out_dim)
    assert jnp.allclose(out, ref_bf16, rtol=1e-3, atol=1e-3), (
        "kernel vs bf16 reference mismatch: "
        f"{float(jnp.max(jnp.abs(out - ref_bf16)))}"
    )

    # Module-semantics check (pure f32 reference; tolerance loosened for bf16 matmuls).
    ref_f32 = _reference_forward_f32(x, raw_params)
    assert jnp.allclose(out, ref_f32, rtol=3e-2, atol=3e-2), (
        "kernel vs f32 reference mismatch: "
        f"{float(jnp.max(jnp.abs(out - ref_f32)))}"
    )

    print("KERNEL_OK")
</pallas_src>

<mosaic_0001>
module attributes {stable_mosaic.version = 11 : i64} {
  func.func @bayes_mlp_kernel(%arg0: i32, %arg1: memref<16x32xf32, #tpu.memory_space<vmem>>, %arg2: memref<32x16xbf16, #tpu.memory_space<vmem>>, %arg3: memref<1x16xf32, #tpu.memory_space<vmem>>, %arg4: memref<16x8xbf16, #tpu.memory_space<vmem>>, %arg5: memref<1x8xf32, #tpu.memory_space<vmem>>, %arg6: memref<8x8xbf16, #tpu.memory_space<vmem>>, %arg7: memref<1x8xf32, #tpu.memory_space<vmem>>, %arg8: memref<16x8xf32, #tpu.memory_space<vmem>>) attributes {dimension_semantics = [#tpu.dimension_semantics<parallel>], iteration_bounds = array<i64: 1>, scalar_prefetch = 0 : i64, scratch_operands = 0 : i64, tpu.core_type = #tpu.core_type<tc>, window_params = [{transform_indices = @transform_0, window_bounds = array<i64: 16, 32>}, {pipeline_mode = #tpu.pipeline_mode<synchronous>, transform_indices = @transform_1, window_bounds = array<i64: 32, 16>}, {pipeline_mode = #tpu.pipeline_mode<synchronous>, transform_indices = @transform_2, window_bounds = array<i64: 1, 16>}, {pipeline_mode = #tpu.pipeline_mode<synchronous>, transform_indices = @transform_3, window_bounds = array<i64: 16, 8>}, {pipeline_mode = #tpu.pipeline_mode<synchronous>, transform_indices = @transform_4, window_bounds = array<i64: 1, 8>}, {pipeline_mode = #tpu.pipeline_mode<synchronous>, transform_indices = @transform_5, window_bounds = array<i64: 8, 8>}, {pipeline_mode = #tpu.pipeline_mode<synchronous>, transform_indices = @transform_6, window_bounds = array<i64: 1, 8>}, {transform_indices = @transform_7, window_bounds = array<i64: 16, 8>}]} {
    %c0 = arith.constant 0 : index
    %c0_0 = arith.constant 0 : index
    %0 = vector.load %arg1[%c0, %c0_0] : memref<16x32xf32, #tpu.memory_space<vmem>>, vector<16x32xf32>
    %1 = arith.truncf %0 : vector<16x32xf32> to vector<16x32xbf16>
    %c0_1 = arith.constant 0 : index
    %c0_2 = arith.constant 0 : index
    %2 = vector.load %arg2[%c0_1, %c0_2] : memref<32x16xbf16, #tpu.memory_space<vmem>>, vector<32x16xbf16>
    %cst = arith.constant dense<0.000000e+00> : vector<16x16xf32>
    %3 = tpu.matmul %1, %2, %cst {dimension_numbers = #tpu.dot_dimension_numbers<[1], [0], [0], [1], [0, 0, 1, 1], [], []>} : vector<16x32xbf16>, vector<32x16xbf16>, vector<16x16xf32> -> vector<16x16xf32>
    %c0_3 = arith.constant 0 : index
    %c0_4 = arith.constant 0 : index
    %4 = vector.load %arg3[%c0_3, %c0_4] : memref<1x16xf32, #tpu.memory_space<vmem>>, vector<1x16xf32>
    %5 = vector.broadcast %4 : vector<1x16xf32> to vector<16x16xf32>
    %6 = arith.addf %3, %5 : vector<16x16xf32>
    %cst_5 = arith.constant 0.000000e+00 : f32
    %7 = vector.broadcast %cst_5 : f32 to vector<16x16xf32>
    %8 = arith.maximumf %6, %7 : vector<16x16xf32>
    %9 = arith.truncf %8 : vector<16x16xf32> to vector<16x16xbf16>
    %c0_6 = arith.constant 0 : index
    %c0_7 = arith.constant 0 : index
    %10 = vector.load %arg4[%c0_6, %c0_7] : memref<16x8xbf16, #tpu.memory_space<vmem>>, vector<16x8xbf16>
    %cst_8 = arith.constant dense<0.000000e+00> : vector<16x8xf32>
    %11 = tpu.matmul %9, %10, %cst_8 {dimension_numbers = #tpu.dot_dimension_numbers<[1], [0], [0], [1], [0, 0, 1, 1], [], []>} : vector<16x16xbf16>, vector<16x8xbf16>, vector<16x8xf32> -> vector<16x8xf32>
    %c0_9 = arith.constant 0 : index
    %c0_10 = arith.constant 0 : index
    %12 = vector.load %arg5[%c0_9, %c0_10] : memref<1x8xf32, #tpu.memory_space<vmem>>, vector<1x8xf32>
    %13 = vector.broadcast %12 : vector<1x8xf32> to vector<16x8xf32>
    %14 = arith.addf %11, %13 : vector<16x8xf32>
    %cst_11 = arith.constant 0.000000e+00 : f32
    %15 = vector.broadcast %cst_11 : f32 to vector<16x8xf32>
    %16 = arith.maximumf %14, %15 : vector<16x8xf32>
    %17 = arith.truncf %16 : vector<16x8xf32> to vector<16x8xbf16>
    %c0_12 = arith.constant 0 : index
    %c0_13 = arith.constant 0 : index
    %18 = vector.load %arg6[%c0_12, %c0_13] : memref<8x8xbf16, #tpu.memory_space<vmem>>, vector<8x8xbf16>
    %cst_14 = arith.constant dense<0.000000e+00> : vector<16x8xf32>
    %19 = tpu.matmul %17, %18, %cst_14 {dimension_numbers = #tpu.dot_dimension_numbers<[1], [0], [0], [1], [0, 0, 1, 1], [], []>} : vector<16x8xbf16>, vector<8x8xbf16>, vector<16x8xf32> -> vector<16x8xf32>
    %c0_15 = arith.constant 0 : index
    %c0_16 = arith.constant 0 : index
    %20 = vector.load %arg7[%c0_15, %c0_16] : memref<1x8xf32, #tpu.memory_space<vmem>>, vector<1x8xf32>
    %21 = vector.broadcast %20 : vector<1x8xf32> to vector<16x8xf32>
    %22 = arith.addf %19, %21 : vector<16x8xf32>
    %c0_17 = arith.constant 0 : index
    %c0_18 = arith.constant 0 : index
    %23 = vector.load %arg8[%c0_17, %c0_18] : memref<16x8xf32, #tpu.memory_space<vmem>>, vector<16x8xf32>
    tpu.vector_store %arg8[%c0_17, %c0_18], %22 {strides = array<i32>} : memref<16x8xf32, #tpu.memory_space<vmem>>, vector<16x8xf32>,
    return
  }
  func.func @transform_0(%arg0: i32) -> (i32, i32) {
    %c0_i32 = arith.constant 0 : i32
    %c0_i32_0 = arith.constant 0 : i32
    return %arg0, %c0_i32 : i32, i32
  }
  func.func @transform_1(%arg0: i32) -> (i32, i32) {
    %c0_i32 = arith.constant 0 : i32
    %c0_i32_0 = arith.constant 0 : i32
    %c0_i32_1 = arith.constant 0 : i32
    return %c0_i32, %c0_i32_0 : i32, i32
  }
  func.func @transform_2(%arg0: i32) -> (i32, i32) {
    %c0_i32 = arith.constant 0 : i32
    %c0_i32_0 = arith.constant 0 : i32
    %c0_i32_1 = arith.constant 0 : i32
    return %c0_i32, %c0_i32_0 : i32, i32
  }
  func.func @transform_3(%arg0: i32) -> (i32, i32) {
    %c0_i32 = arith.constant 0 : i32
    %c0_i32_0 = arith.constant 0 : i32
    %c0_i32_1 = arith.constant 0 : i32
    return %c0_i32, %c0_i32_0 : i32, i32
  }
  func.func @transform_4(%arg0: i32) -> (i32, i32) {
    %c0_i32 = arith.constant 0 : i32
    %c0_i32_0 = arith.constant 0 : i32
    %c0_i32_1 = arith.constant 0 : i32
    return %c0_i32, %c0_i32_0 : i32, i32
  }
  func.func @transform_5(%arg0: i32) -> (i32, i32) {
    %c0_i32 = arith.constant 0 : i32
    %c0_i32_0 = arith.constant 0 : i32
    %c0_i32_1 = arith.constant 0 : i32
    return %c0_i32, %c0_i32_0 : i32, i32
  }
  func.func @transform_6(%arg0: i32) -> (i32, i32) {
    %c0_i32 = arith.constant 0 : i32
    %c0_i32_0 = arith.constant 0 : i32
    %c0_i32_1 = arith.constant 0 : i32
    return %c0_i32, %c0_i32_0 : i32, i32
  }
  func.func @transform_7(%arg0: i32) -> (i32, i32) {
    %c0_i32 = arith.constant 0 : i32
    %c0_i32_0 = arith.constant 0 : i32
    return %arg0, %c0_i32 : i32, i32
  }
}

</mosaic_0001>

<llo_original>
// kernel: bayesian_enet_forward.1
$region0: #{bayesian_enet_forward.1}
  #allocation0 [shape = 'u32[]', space=smem, size = 0x4, offset = 0x4, fixed_abs, tag = 'smem constant byte address 0x4 - core index']
  #allocation1 [shape = 'u32[144,128]{1,0:T(1,128)}', space=vmem, size = 0x12000, scoped, tag = 'internal scratch']
  %s0 = inlined_call_operand.vmem [shape: f32[16,32], index: 0, kind: input, shape index: {}]
  %s1 = inlined_call_operand.vmem [shape: bf16[32,16], index: 1, kind: input, shape index: {}]
  %s2 = inlined_call_operand.vmem [shape: f32[1,16], index: 2, kind: input, shape index: {}]
  %s3 = inlined_call_operand.vmem [shape: bf16[16,8], index: 3, kind: input, shape index: {}]
  %s4 = inlined_call_operand.vmem [shape: f32[1,8], index: 4, kind: input, shape index: {}]
  %s5 = inlined_call_operand.vmem [shape: bf16[8,8], index: 5, kind: input, shape index: {}]
  %s6 = inlined_call_operand.vmem [shape: f32[1,8], index: 6, kind: input, shape index: {}]
  %s7 = inlined_call_operand.vmem [shape: f32[16,8], index: 7, kind: output, shape index: {}]
  %s8 = sld [smem:[#allocation0]]
  $region38: #{bayesian_enet_forward.1} parent=0
    _
  %s10 = ssub.s32 1, %s8
  %s11 = scalar_select 0, %s10, %s8
  // Predicated region
  $region2: #{bayesian_enet_forward.1} parent=0 // pred_check
    _
  $region3: #{bayesian_enet_forward.1} parent=0 // pred_check_branch
    %13 = sbr.rel (0) target = $region5
  $region4: #{bayesian_enet_forward.1} parent=0 // pred_region
    _
  $region5: #{bayesian_enet_forward.1} parent=0 // pred_fallthru
    _
  // Predicated region
  $region6: #{bayesian_enet_forward.1} parent=0 // pred_check
    _
  $region7: #{bayesian_enet_forward.1} parent=0 // pred_check_branch
    %15 = sbr.rel (0) target = $region9
  $region8: #{bayesian_enet_forward.1} parent=0 // pred_region
    _
  $region9: #{bayesian_enet_forward.1} parent=0 // pred_fallthru
    _
  // Predicated region
  $region10: #{bayesian_enet_forward.1} parent=0 // pred_check
    _
  $region11: #{bayesian_enet_forward.1} parent=0 // pred_check_branch
    %17 = sbr.rel (0) target = $region13
  $region12: #{bayesian_enet_forward.1} parent=0 // pred_region
    _
  $region13: #{bayesian_enet_forward.1} parent=0 // pred_fallthru
    _
  // Predicated region
  $region14: #{bayesian_enet_forward.1} parent=0 // pred_check
    _
  $region15: #{bayesian_enet_forward.1} parent=0 // pred_check_branch
    %19 = sbr.rel (0) target = $region17
  $region16: #{bayesian_enet_forward.1} parent=0 // pred_region
    _
  $region17: #{bayesian_enet_forward.1} parent=0 // pred_fallthru
    _
  // Predicated region
  $region18: #{bayesian_enet_forward.1} parent=0 // pred_check
    _
  $region19: #{bayesian_enet_forward.1} parent=0 // pred_check_branch
    %21 = sbr.rel (0) target = $region21
  $region20: #{bayesian_enet_forward.1} parent=0 // pred_region
    _
  $region21: #{bayesian_enet_forward.1} parent=0 // pred_fallthru
    _
  // Predicated region
  $region22: #{bayesian_enet_forward.1} parent=0 // pred_check
    _
  $region23: #{bayesian_enet_forward.1} parent=0 // pred_check_branch
    %23 = sbr.rel (0) target = $region25
  $region24: #{bayesian_enet_forward.1} parent=0 // pred_region
    _
  $region25: #{bayesian_enet_forward.1} parent=0 // pred_fallthru
    _
  // Predicated region
  $region26: #{bayesian_enet_forward.1} parent=0 // pred_check
    _
  $region27: #{bayesian_enet_forward.1} parent=0 // pred_check_branch
    %25 = sbr.rel (0) target = $region29
  $region28: #{bayesian_enet_forward.1} parent=0 // pred_region
    _
  $region29: #{bayesian_enet_forward.1} parent=0 // pred_fallthru
    _
  %v27 = vld [vmem:[%s0] sm:$0xff]
  %v28 = vld [vmem:[%s0 + $0x8] sm:$0xff]
  %v29 = vpack.c.bf16 %v28, %v27
  %v30 = vld [vmem:[%s1] sm:$0xf]
  %v31 = vld [vmem:[%s1 + $0x4] sm:$0xf]
  %v32 = vld [vmem:[%s1 + $0x8] sm:$0xf]
  %v33 = vld [vmem:[%s1 + $0xc] sm:$0xf]
  %v34 = vld [vmem:[%s2] sm:$0x1]
  %v36 = vlaneseq
  %v37 = vshrl.u32 %v36, 7
  %v38 = vsub.s32 0, %v37
  %v39 = vrot.slane %v34, %v38
  %v45 = vunpack.c.l.b16 %v30
  %v46 = vunpack.c.l.b16 %v31
  %v47 = vunpack.c.l.b16 %v32
  %v48 = vunpack.c.l.b16 %v33
  %v49 = vpack.c.b16 %v46, %v45
  %v50 = vpack.c.b16 %v48, %v47
  %vm53 = vcmask 261120
  %v55 = vsel %vm53, %v29, 0
  %57 = vmatprep.subr.bf16.mxu0 0
  %58 = vmatpush1.bf16.msra.mxu0 0
  %59 = vmatprep.subr.bf16.mxu0 0
  %60 = vmatpush1.bf16.msra.mxu0 0
  %61 = vmatprep.subr.bf16.mxu0 0
  %62 = vmatpush1.bf16.msra.mxu0 0
  %63 = vmatprep.subr.bf16.mxu0 0
  %64 = vmatpush1.bf16.msra.mxu0 0
  %65 = vmatprep.subr.bf16.mxu0 0
  %66 = vmatpush1.bf16.msra.mxu0 0
  %67 = vmatprep.subr.bf16.mxu0 0
  %68 = vmatpush1.bf16.msra.mxu0 0
  %69 = vmatprep.subr.bf16.mxu0 0
  %70 = vmatpush1.bf16.msra.mxu0 %v50
  %71 = vmatprep.subr.bf16.mxu0 0
  %72 = vmatpush1.bf16.msra.mxu0 %v49
  %73 = vmatprep.subr.bf16.mxu0 0
  %74 = vmatpush2.bf16.msra.mxu0 0
  %75 = vmatprep.subr.bf16.mxu0 0
  %76 = vmatpush2.bf16.msra.mxu0 0
  %77 = vmatprep.subr.bf16.mxu0 0
  %78 = vmatpush2.bf16.msra.mxu0 0
  %79 = vmatprep.subr.bf16.mxu0 0
  %80 = vmatpush2.bf16.msra.mxu0 0
  %81 = vmatprep.subr.bf16.mxu0 0
  %82 = vmatpush2.bf16.msra.mxu0 0
  %83 = vmatprep.subr.bf16.mxu0 0
  %84 = vmatpush2.bf16.msra.mxu0 0
  %85 = vmatprep.subr.bf16.mxu0 0
  %86 = vmatpush2.bf16.msra.mxu0 0
  %87 = vmatprep.subr.bf16.mxu0 0
  %88 = vmatpush2.bf16.msra.mxu0 0
  %89 = vmatprep.mubr.bf16.mxu0 0
  %90 = vmatmul.mubr.bf16.gmra.mxu0 %v55
  %v91 = vpop.f32.mrf.mxu0
  %v92 = vadd.f32 %v39, %v91
  %v93 = vpop.f32.mrf.mxu0
  %v94 = vpop.f32.mrf.mxu0
  %v95 = vadd.f32 %v39, %v94
  %v96 = vpop.f32.mrf.mxu0
  %97 = vdwg.mxu0
  %v98 = vmax.f32 %v92, 0.0
  %v99 = vmax.f32 %v95, 0.0
  %v100 = vpack.c.bf16 %v99, %v98
  %v101 = vld [vmem:[%s3] sm:$0xf]
  %v102 = vld [vmem:[%s3 + $0x4] sm:$0xf]
  %v103 = vld [vmem:[%s4] sm:$0x1]
  %v105 = vlaneseq
  %v106 = vshrl.u32 %v105, 7
  %v107 = vsub.s32 0, %v106
  %v108 = vrot.slane %v103, %v107
  %v112 = vunpack.c.l.b16 %v101
  %v113 = vunpack.c.l.b16 %v102
  %v114 = vpack.c.b16 %v113, %v112
  %vm116 = vcmask 130048
  %v118 = vsel %vm116, %v100, 0
  %120 = vmatprep.subr.bf16.mxu0 0
  %121 = vmatpush1.bf16.msra.mxu0 0
  %122 = vmatprep.subr.bf16.mxu0 0
  %123 = vmatpush1.bf16.msra.mxu0 0
  %124 = vmatprep.subr.bf16.mxu0 0
  %125 = vmatpush1.bf16.msra.mxu0 0
  %126 = vmatprep.subr.bf16.mxu0 0
  %127 = vmatpush1.bf16.msra.mxu0 0
  %128 = vmatprep.subr.bf16.mxu0 0
  %129 = vmatpush1.bf16.msra.mxu0 0
  %130 = vmatprep.subr.bf16.mxu0 0
  %131 = vmatpush1.bf16.msra.mxu0 0
  %132 = vmatprep.subr.bf16.mxu0 0
  %133 = vmatpush1.bf16.msra.mxu0 0
  %134 = vmatprep.subr.bf16.mxu0 0
  %135 = vmatpush1.bf16.msra.mxu0 %v114
  %136 = vmatprep.subr.bf16.mxu0 0
  %137 = vmatpush2.bf16.msra.mxu0 0
  %138 = vmatprep.subr.bf16.mxu0 0
  %139 = vmatpush2.bf16.msra.mxu0 0
  %140 = vmatprep.subr.bf16.mxu0 0
  %141 = vmatpush2.bf16.msra.mxu0 0
  %142 = vmatprep.subr.bf16.mxu0 0
  %143 = vmatpush2.bf16.msra.mxu0 0
  %144 = vmatprep.subr.bf16.mxu0 0
  %145 = vmatpush2.bf16.msra.mxu0 0
  %146 = vmatprep.subr.bf16.mxu0 0
  %147 = vmatpush2.bf16.msra.mxu0 0
  %148 = vmatprep.subr.bf16.mxu0 0
  %149 = vmatpush2.bf16.msra.mxu0 0
  %150 = vmatprep.subr.bf16.mxu0 0
  %151 = vmatpush2.bf16.msra.mxu0 0
  %152 = vmatprep.mubr.bf16.mxu0 0
  %153 = vmatmul.mubr.bf16.gmra.mxu0 %v118
  %v154 = vpop.f32.mrf.mxu0
  %v155 = vadd.f32 %v108, %v154
  %v156 = vpop.f32.mrf.mxu0
  %v157 = vpop.f32.mrf.mxu0
  %v158 = vadd.f32 %v108, %v157
  %v159 = vpop.f32.mrf.mxu0
  %160 = vdwg.mxu0
  %v161 = vmax.f32 %v155, 0.0
  %v162 = vmax.f32 %v158, 0.0
  %v163 = vpack.c.bf16 %v162, %v161
  %v164 = vld [vmem:[%s5] sm:$0xf]
  %v165 = vld [vmem:[%s6] sm:$0x1]
  %v167 = vlaneseq
  %v168 = vshrl.u32 %v167, 7
  %v169 = vsub.s32 0, %v168
  %v170 = vrot.slane %v165, %v169
  %vm172 = vcmask 64512
  %v174 = vsel %vm172, %v163, 0
  %vm176 = vcmask 1043456
  %v178 = vsel %vm176, %v164, 0
  %180 = vmatprep.subr.bf16.mxu0 0
  %181 = vmatpush1.bf16.msra.mxu0 0
  %182 = vmatprep.subr.bf16.mxu0 0
  %183 = vmatpush1.bf16.msra.mxu0 0
  %184 = vmatprep.subr.bf16.mxu0 0
  %185 = vmatpush1.bf16.msra.mxu0 0
  %186 = vmatprep.subr.bf16.mxu0 0
  %187 = vmatpush1.bf16.msra.mxu0 0
  %188 = vmatprep.subr.bf16.mxu0 0
  %189 = vmatpush1.bf16.msra.mxu0 0
  %190 = vmatprep.subr.bf16.mxu0 0
  %191 = vmatpush1.bf16.msra.mxu0 0
  %192 = vmatprep.subr.bf16.mxu0 0
  %193 = vmatpush1.bf16.msra.mxu0 0
  %194 = vmatprep.subr.bf16.mxu0 0
  %195 = vmatpush1.bf16.msra.mxu0 %v178
  %196 = vmatprep.subr.bf16.mxu0 0
  %197 = vmatpush2.bf16.msra.mxu0 0
  %198 = vmatprep.subr.bf16.mxu0 0
  %199 = vmatpush2.bf16.msra.mxu0 0
  %200 = vmatprep.subr.bf16.mxu0 0
  %201 = vmatpush2.bf16.msra.mxu0 0
  %202 = vmatprep.subr.bf16.mxu0 0
  %203 = vmatpush2.bf16.msra.mxu0 0
  %204 = vmatprep.subr.bf16.mxu0 0
  %205 = vmatpush2.bf16.msra.mxu0 0
  %206 = vmatprep.subr.bf16.mxu0 0
  %207 = vmatpush2.bf16.msra.mxu0 0
  %208 = vmatprep.subr.bf16.mxu0 0
  %209 = vmatpush2.bf16.msra.mxu0 0
  %210 = vmatprep.subr.bf16.mxu0 0
  %211 = vmatpush2.bf16.msra.mxu0 0
  %212 = vmatprep.mubr.bf16.mxu0 0
  %213 = vmatmul.mubr.bf16.gmra.mxu0 %v174
  %v214 = vpop.f32.mrf.mxu0
  %v215 = vadd.f32 %v170, %v214
  %v216 = vpop.f32.mrf.mxu0
  %v217 = vpop.f32.mrf.mxu0
  %v218 = vadd.f32 %v170, %v217
  %v219 = vpop.f32.mrf.mxu0
  %220 = vdwg.mxu0
  %221 = vst.msk [vmem:[%s7] sm:$0xff] %vm172, %v215
  %222 = vst.msk [vmem:[%s7 + $0x8] sm:$0xff] %vm172, %v218
  // Predicated region
  $region30: #{bayesian_enet_forward.1} parent=0 // pred_check
    _
  $region31: #{bayesian_enet_forward.1} parent=0 // pred_check_branch
    %224 = sbr.rel (0) target = $region33
  $region32: #{bayesian_enet_forward.1} parent=0 // pred_region
    _
  $region33: #{bayesian_enet_forward.1} parent=0 // pred_fallthru
    _
  // Predicated region
  $region34: #{bayesian_enet_forward.1} parent=0 // pred_check
    _
  $region35: #{bayesian_enet_forward.1} parent=0 // pred_check_branch
    %226 = sbr.rel (0) target = $region37
  $region36: #{bayesian_enet_forward.1} parent=0 // pred_region
    _
  $region37: #{bayesian_enet_forward.1} parent=0 // pred_fallthru
    _

</llo_original>
